<compile_context>
chip_gen: v7x
topology: tpu7x:2x2x1
jax: 0.10.0
libtpu: 0.0.40
codegen_flags: <defaults>
</compile_context>

<pallas_src>
import jax
import jax.numpy as jnp
import numpy as np
from jax.experimental import pallas as pl
from jax.experimental.pallas import tpu as pltpu

_L2_EPS = 1e-12          # F.normalize default eps
_LANE = 128
_MULTI_TILE_QUANTUM = 1024   # multi-tile TBN must be a multiple of 1024 so the lane-dense
                             # index block (1, TBN//128, 128) stays (8, 128)-tiled


def _l2norm(t, eps=_L2_EPS):
    # x / max(||x||, eps)  ==  x * rsqrt(max(||x||^2, eps^2))
    ssq = jnp.sum(jnp.square(t), axis=-1, keepdims=True)
    return t * jax.lax.rsqrt(jnp.maximum(ssq, eps * eps))


def _codebook_index_kernel(x_ref, en_ref, ind_ref):
    # x_ref:   (1, TBN, D)           token tile (input dtype)
    # en_ref:  (1, C, D) bf16        pre-l2-normalized codebook (resident across tiles)
    # ind_ref: (1, TBN//128, 128)    int32 indices, lane-dense layout
    x = x_ref[0].astype(jnp.float32)                                    # (TBN, D)
    ssq = jnp.sum(x * x, axis=-1, keepdims=True)
    xn = (x * jax.lax.rsqrt(jnp.maximum(ssq, _L2_EPS * _L2_EPS))).astype(jnp.bfloat16)

    en = en_ref[0]                                                      # (C, D) bf16
    # cosine-similarity "distances": (TBN, C) on the MXU, bf16 in / f32 accumulate,
    # contracting the last dim of both operands (no materialized transpose).
    dist = jax.lax.dot_general(
        xn, en, (((1,), (1,)), ((), ())), preferred_element_type=jnp.float32)

    # temperature == 0 path of gumbel_sample -> plain argmax over the codebook axis.
    idx = jnp.argmax(dist, axis=-1).astype(jnp.int32)                   # (TBN,)
    ind_ref[0] = idx.reshape(ind_ref.shape[1], ind_ref.shape[2])        # lane-dense store


def _vmem_capacity_bytes():
    try:
        return int(pltpu.get_tpu_info().vmem_capacity_bytes)
    except Exception:
        return 64 * 1024 * 1024   # conservative default (v7x per-TC)


def _plan_tiles(BN, C, D, x_itemsize):
    """Generation/shape-aware token-tile size and scoped-VMEM limit."""
    vmem_cap = _vmem_capacity_bytes()
    budget = max(vmem_cap - 16 * 1024 * 1024, 8 * 1024 * 1024)   # >=16 MiB headroom
    codebook_bytes = 2 * C * D                                   # bf16, single-buffered
    # per-token live bytes: double-buffered x tile + f32/bf16 in-kernel copies of x,
    # f32 (1, C) dist row, idx out, plus slack for argmax temporaries.
    per_token = 2 * D * x_itemsize + 6 * D + 6 * C + 16

    # 128 MiB chips (v5e/v6e) get bigger token tiles; 64 MiB v7x stays at <=1024.
    max_tbn = 2048 if vmem_cap >= 96 * 1024 * 1024 else 1024
    while max_tbn > _MULTI_TILE_QUANTUM and codebook_bytes + max_tbn * per_token > budget:
        max_tbn -= _MULTI_TILE_QUANTUM

    if BN <= max_tbn:
        tbn = max(_LANE, ((BN + _LANE - 1) // _LANE) * _LANE)    # single tile, 128-aligned
    else:
        tbn = max_tbn                                            # multiple of 1024

    live = 2 * codebook_bytes + tbn * per_token                  # generous (covers fallback)
    vmem_limit = int(min(max(2 * live, 32 * 1024 * 1024),
                         max(vmem_cap - 8 * 1024 * 1024, 16 * 1024 * 1024)))
    return tbn, vmem_limit


def _run_index_kernel(flat, en, TBN, vmem_limit, dim_sem, cost):
    H, BN_pad, D = flat.shape
    C = en.shape[1]
    n_tiles = BN_pad // TBN

    def call(codebook_single_buffered):
        cb_kwargs = {}
        if codebook_single_buffered:
            # codebook block index is constant in t -> default double-buffering just holds
            # a dead second copy; single-buffer it to halve resident codebook VMEM.
            cb_kwargs = dict(pipeline_mode=pl.Buffered(1))
        return pl.pallas_call(
            _codebook_index_kernel,
            grid=(H, n_tiles),
            in_specs=[
                pl.BlockSpec((1, TBN, D), lambda h, t: (h, t, 0)),
                pl.BlockSpec((1, C, D), lambda h, t: (h, 0, 0), **cb_kwargs),
            ],
            out_specs=pl.BlockSpec((1, TBN // _LANE, _LANE), lambda h, t: (h, t, 0)),
            out_shape=jax.ShapeDtypeStruct((H, BN_pad // _LANE, _LANE), jnp.int32),
            compiler_params=pltpu.CompilerParams(
                dimension_semantics=dim_sem,
                vmem_limit_bytes=vmem_limit,
            ),
            cost_estimate=cost,
        )(flat, en)

    try:
        return call(True)
    except Exception:   # pipeline_mode / Buffered(1) unsupported -> default buffering
        return call(False)


def cosine_sim_codebook_forward(x, embed):
    """Eval-mode forward of CosineSimCodebook.

    x:     (H, B, N, D) or (B, N, D)   feature-last
    embed: (H, C, D)
    returns (quantize, embed_ind) with the same rank convention as the torch module.
    """
    needs_codebook_dim = x.ndim < 4
    if needs_codebook_dim:
        x = x[None]
    H, B, N, D = x.shape
    C = embed.shape[1]
    BN = B * N
    flat = x.reshape(H, BN, D)

    TBN, vmem_limit = _plan_tiles(BN, C, D, flat.dtype.itemsize)
    BN_pad = ((BN + TBN - 1) // TBN) * TBN
    if BN_pad != BN:
        flat = jnp.pad(flat, ((0, 0), (0, BN_pad - BN), (0, 0)))

    # Hoisted: normalize the codebook once; bf16 operands for the MXU dist matmul.
    en = _l2norm(embed.astype(jnp.float32)).astype(jnp.bfloat16)

    # Keep codebook resident across token tiles when H >= 2 (split parallel work along h);
    # with a single codebook, let the token axis be split across v7x's two cores.
    dim_sem = ("parallel", "arbitrary") if H >= 2 else ("parallel", "parallel")

    cost = pl.CostEstimate(
        flops=2 * H * BN_pad * C * D,                  # dist matmul only
        transcendentals=H * BN_pad,                    # one rsqrt per token
        bytes_accessed=int(flat.size) * flat.dtype.itemsize
        + int(en.size) * en.dtype.itemsize
        + H * BN_pad * 4,                              # index output
    )

    ind_lanes = _run_index_kernel(flat, en, TBN, vmem_limit, dim_sem, cost)

    ind_flat = ind_lanes.reshape(H, BN_pad)[:, :BN]    # drop padded tokens
    # Exact gather of the UN-normalized codebook rows (outside the kernel): removes the
    # gather matmul, one resident C*D buffer and the quantize HBM writeback, and is
    # bit-exact with embed[embed_ind].
    quantize = jnp.take_along_axis(embed, ind_flat[..., None], axis=1)  # (H, BN, D)

    quantize = quantize.reshape(H, B, N, D)
    embed_ind = ind_flat.reshape(H, B, N)
    if needs_codebook_dim:
        quantize, embed_ind = quantize[0], embed_ind[0]
    return quantize, embed_ind


if __name__ == "__main__":
    key = jax.random.PRNGKey(0)
    H, B, N, D, C = 2, 2, 8, 32, 64   # num_codebooks, batch, seq, dim, codebook_size
    k_x, k_e = jax.random.split(key)

    # deterministic init mirroring __init__: kaiming-uniform-ish then l2norm
    bound = (6.0 / (C * D)) ** 0.5
    embed = jax.random.uniform(k_e, (H, C, D), jnp.float32, -bound, bound)
    embed = _l2norm(embed)

    x = jax.random.normal(k_x, (H, B, N, D), dtype=jnp.float32)

    quantize, embed_ind = cosine_sim_codebook_forward(x, embed)
    jax.block_until_ready((quantize, embed_ind))

    # ---- correctness checks (robust to bf16 operand rounding of the dist matmul) ----
    xf = _l2norm(x.reshape(H, B * N, D).astype(jnp.float32))
    en_ref = _l2norm(embed.astype(jnp.float32))
    dist_f32 = jnp.einsum("hnd,hcd->hnc", xf, en_ref,
                          preferred_element_type=jnp.float32)            # (H, BN, C)

    ind_flat = embed_ind.reshape(H, B * N)
    assert quantize.shape == (H, B, N, D) and embed_ind.shape == (H, B, N)
    assert np.all(np.asarray(ind_flat) >= 0) and np.all(np.asarray(ind_flat) < C)

    # 1) quantize must be the exact gather of the un-normalized embed at the kernel's indices
    q_expected = jax.vmap(lambda e, i: e[i])(embed, ind_flat)            # (H, BN, D)
    assert np.array_equal(np.asarray(quantize.reshape(H, B * N, D)),
                          np.asarray(q_expected)), "quantize != embed[embed_ind]"

    # 2) kernel indices must achieve (near-)maximal f32 cosine similarity
    #    (bf16 dist operands can only move the achieved similarity by O(1e-2))
    d_at_kernel = jnp.take_along_axis(dist_f32, ind_flat[..., None], axis=-1)[..., 0]
    d_best = dist_f32.max(axis=-1)
    gap = np.asarray(d_best - d_at_kernel)
    assert np.all(gap <= 3e-2), f"argmax not (near-)optimal, max gap {gap.max()}"

    print("KERNEL_OK")
</pallas_src>

<mosaic_0001>
module attributes {stable_mosaic.version = 11 : i64} {
  func.func @_codebook_index_kernel(%arg0: i32, %arg1: i32, %arg2: memref<1x128x32xf32, #tpu.memory_space<vmem>>, %arg3: memref<1x64x32xbf16, #tpu.memory_space<vmem>>, %arg4: memref<1x1x128xi32, #tpu.memory_space<vmem>>) attributes {dimension_semantics = [#tpu.dimension_semantics<parallel>, #tpu.dimension_semantics<arbitrary>], iteration_bounds = array<i64: 2, 1>, scalar_prefetch = 0 : i64, scratch_operands = 0 : i64, tpu.core_type = #tpu.core_type<tc>, window_params = [{transform_indices = @transform_0, window_bounds = array<i64: 1, 128, 32>}, {pipeline_mode = #tpu.pipeline_mode<synchronous>, transform_indices = @transform_1, window_bounds = array<i64: 1, 64, 32>}, {transform_indices = @transform_2, window_bounds = array<i64: 1, 1, 128>}]} {
    %c0 = arith.constant 0 : index
    %c0_0 = arith.constant 0 : index
    %c0_1 = arith.constant 0 : index
    %0 = vector.load %arg2[%c0, %c0_0, %c0_1] : memref<1x128x32xf32, #tpu.memory_space<vmem>>, vector<1x128x32xf32>
    %1 = vector.shape_cast %0 : vector<1x128x32xf32> to vector<128x32xf32>
    %2 = arith.mulf %1, %1 : vector<128x32xf32>
    %cst = arith.constant dense<0.000000e+00> : vector<128xf32>
    %3 = vector.multi_reduction <add>, %2, %cst [1] : vector<128x32xf32> to vector<128xf32>
    %4 = vector.shape_cast %3 : vector<128xf32> to vector<128x1xf32>
    %cst_2 = arith.constant 1.000000e-24 : f32
    %5 = vector.broadcast %cst_2 : f32 to vector<128x1xf32>
    %6 = arith.maximumf %4, %5 : vector<128x1xf32>
    %7 = math.rsqrt %6 : vector<128x1xf32>
    %8 = vector.broadcast %7 : vector<128x1xf32> to vector<128x32xf32>
    %9 = arith.mulf %1, %8 : vector<128x32xf32>
    %10 = arith.truncf %9 : vector<128x32xf32> to vector<128x32xbf16>
    %c0_3 = arith.constant 0 : index
    %c0_4 = arith.constant 0 : index
    %c0_5 = arith.constant 0 : index
    %11 = vector.load %arg3[%c0_3, %c0_4, %c0_5] : memref<1x64x32xbf16, #tpu.memory_space<vmem>>, vector<1x64x32xbf16>
    %12 = vector.shape_cast %11 : vector<1x64x32xbf16> to vector<64x32xbf16>
    %cst_6 = arith.constant dense<0.000000e+00> : vector<128x64xf32>
    %13 = tpu.matmul %10, %12, %cst_6 {dimension_numbers = #tpu.dot_dimension_numbers<[1], [1], [0], [0], [0, 0, 1, 0], [], []>} : vector<128x32xbf16>, vector<64x32xbf16>, vector<128x64xf32> -> vector<128x64xf32>
    %14 = tpu.reduce_index %13 {axis = 1 : i32, kind = #tpu.reduction_kind<arg_max>} : vector<128x64xf32> -> vector<128xi32>
    %15 = vector.shape_cast %14 : vector<128xi32> to vector<1x128xi32>
    %c0_7 = arith.constant 0 : index
    %c0_8 = arith.constant 0 : index
    %c0_9 = arith.constant 0 : index
    %16 = vector.load %arg4[%c0_7, %c0_8, %c0_9] : memref<1x1x128xi32, #tpu.memory_space<vmem>>, vector<1x1x128xi32>
    %17 = vector.shape_cast %16 : vector<1x1x128xi32> to vector<1x128xi32>
    %18 = vector.shape_cast %15 : vector<1x128xi32> to vector<1x1x128xi32>
    tpu.vector_store %arg4[%c0_7, %c0_8, %c0_9], %18 {strides = array<i32>} : memref<1x1x128xi32, #tpu.memory_space<vmem>>, vector<1x1x128xi32>,
    return
  }
  func.func @transform_0(%arg0: i32, %arg1: i32) -> (i32, i32, i32) {
    %c0_i32 = arith.constant 0 : i32
    %c0_i32_0 = arith.constant 0 : i32
    return %arg0, %arg1, %c0_i32 : i32, i32, i32
  }
  func.func @transform_1(%arg0: i32, %arg1: i32) -> (i32, i32, i32) {
    %c0_i32 = arith.constant 0 : i32
    %c0_i32_0 = arith.constant 0 : i32
    %c0_i32_1 = arith.constant 0 : i32
    return %arg0, %c0_i32, %c0_i32_0 : i32, i32, i32
  }
  func.func @transform_2(%arg0: i32, %arg1: i32) -> (i32, i32, i32) {
    %c0_i32 = arith.constant 0 : i32
    %c0_i32_0 = arith.constant 0 : i32
    return %arg0, %arg1, %c0_i32 : i32, i32, i32
  }
}

module attributes {stable_mosaic.version = 11 : i64} {
  func.func @_codebook_index_kernel(%arg0: i32, %arg1: i32, %arg2: memref<1x128x32xf32, #tpu.memory_space<vmem>>, %arg3: memref<1x64x32xbf16, #tpu.memory_space<vmem>>, %arg4: memref<1x1x128xi32, #tpu.memory_space<vmem>>) attributes {dimension_semantics = [#tpu.dimension_semantics<parallel>, #tpu.dimension_semantics<arbitrary>], iteration_bounds = array<i64: 2, 1>, scalar_prefetch = 0 : i64, scratch_operands = 0 : i64, tpu.core_type = #tpu.core_type<tc>, window_params = [{transform_indices = @transform_0, window_bounds = array<i64: 1, 128, 32>}, {transform_indices = @transform_1, window_bounds = array<i64: 1, 64, 32>}, {transform_indices = @transform_2, window_bounds = array<i64: 1, 1, 128>}]} {
    %c0 = arith.constant 0 : index
    %c0_0 = arith.constant 0 : index
    %c0_1 = arith.constant 0 : index
    %0 = vector.load %arg2[%c0, %c0_0, %c0_1] : memref<1x128x32xf32, #tpu.memory_space<vmem>>, vector<1x128x32xf32>
    %1 = vector.shape_cast %0 : vector<1x128x32xf32> to vector<128x32xf32>
    %2 = arith.mulf %1, %1 : vector<128x32xf32>
    %cst = arith.constant dense<0.000000e+00> : vector<128xf32>
    %3 = vector.multi_reduction <add>, %2, %cst [1] : vector<128x32xf32> to vector<128xf32>
    %4 = vector.shape_cast %3 : vector<128xf32> to vector<128x1xf32>
    %cst_2 = arith.constant 1.000000e-24 : f32
    %5 = vector.broadcast %cst_2 : f32 to vector<128x1xf32>
    %6 = arith.maximumf %4, %5 : vector<128x1xf32>
    %7 = math.rsqrt %6 : vector<128x1xf32>
    %8 = vector.broadcast %7 : vector<128x1xf32> to vector<128x32xf32>
    %9 = arith.mulf %1, %8 : vector<128x32xf32>
    %10 = arith.truncf %9 : vector<128x32xf32> to vector<128x32xbf16>
    %c0_3 = arith.constant 0 : index
    %c0_4 = arith.constant 0 : index
    %c0_5 = arith.constant 0 : index
    %11 = vector.load %arg3[%c0_3, %c0_4, %c0_5] : memref<1x64x32xbf16, #tpu.memory_space<vmem>>, vector<1x64x32xbf16>
    %12 = vector.shape_cast %11 : vector<1x64x32xbf16> to vector<64x32xbf16>
    %cst_6 = arith.constant dense<0.000000e+00> : vector<128x64xf32>
    %13 = tpu.matmul %10, %12, %cst_6 {dimension_numbers = #tpu.dot_dimension_numbers<[1], [1], [0], [0], [0, 0, 1, 0], [], []>} : vector<128x32xbf16>, vector<64x32xbf16>, vector<128x64xf32> -> vector<128x64xf32>
    %14 = tpu.reduce_index %13 {axis = 1 : i32, kind = #tpu.reduction_kind<arg_max>} : vector<128x64xf32> -> vector<128xi32>
    %15 = vector.shape_cast %14 : vector<128xi32> to vector<1x128xi32>
    %c0_7 = arith.constant 0 : index
    %c0_8 = arith.constant 0 : index
    %c0_9 = arith.constant 0 : index
    %16 = vector.load %arg4[%c0_7, %c0_8, %c0_9] : memref<1x1x128xi32, #tpu.memory_space<vmem>>, vector<1x1x128xi32>
    %17 = vector.shape_cast %16 : vector<1x1x128xi32> to vector<1x128xi32>
    %18 = vector.shape_cast %15 : vector<1x128xi32> to vector<1x1x128xi32>
    tpu.vector_store %arg4[%c0_7, %c0_8, %c0_9], %18 {strides = array<i32>} : memref<1x1x128xi32, #tpu.memory_space<vmem>>, vector<1x1x128xi32>,
    return
  }
  func.func @transform_0(%arg0: i32, %arg1: i32) -> (i32, i32, i32) {
    %c0_i32 = arith.constant 0 : i32
    %c0_i32_0 = arith.constant 0 : i32
    return %arg0, %arg1, %c0_i32 : i32, i32, i32
  }
  func.func @transform_1(%arg0: i32, %arg1: i32) -> (i32, i32, i32) {
    %c0_i32 = arith.constant 0 : i32
    %c0_i32_0 = arith.constant 0 : i32
    %c0_i32_1 = arith.constant 0 : i32
    return %arg0, %c0_i32, %c0_i32_0 : i32, i32, i32
  }
  func.func @transform_2(%arg0: i32, %arg1: i32) -> (i32, i32, i32) {
    %c0_i32 = arith.constant 0 : i32
    %c0_i32_0 = arith.constant 0 : i32
    return %arg0, %arg1, %c0_i32 : i32, i32, i32
  }
}

</mosaic_0001>

<llo_original>
// kernel: tpu_custom_call.1
$region0: #{tpu_custom_call.1}
  #allocation0 [shape = 'u32[]', space=smem, size = 0x4, offset = 0x4, fixed_abs, tag = 'smem constant byte address 0x4 - core index']
  #allocation1 [shape = 'u32[144,128]{1,0:T(1,128)}', space=vmem, size = 0x12000, scoped, tag = 'internal scratch']
  %s0 = inlined_call_operand.vmem [shape: f32[2,128,32], index: 0, kind: input, shape index: {}]
  %s1 = inlined_call_operand.vmem [shape: bf16[2,64,32], index: 1, kind: input, shape index: {}]
  %s2 = inlined_call_operand.hbm [shape: s32[2,1,128], index: 2, kind: output, shape index: {}]
  %s3 = sld [smem:[#allocation0]]
  $region41: #{tpu_custom_call.1} parent=0
    _
  %s5 = ssub.s32 1, %s3
  %s6 = scalar_select 0, %s5, %s3
  $region1: #{tpu_custom_call.1} parent=0
    #allocation2 [shape = 'u8[1024]{0}', space=vmem, size = 0x400, scoped, tag = 'output window, operand 0']
    #allocation3 [shape = 's32[2]{0}', space=sflag, size = 0x8, scoped, tag = 'scoped memory for tpu_custom_call.1']
    %7 = vsyncpa [#allocation3], 0
    %s8 = scalar_lea.sflag [#allocation3], 1
    %9 = vsyncpa %s8, 0
    loop: start=0, step=1, limit=4
    $region2: #{tpu_custom_call.1} parent=1 // loop_pre_header
      _
    $region3: #{tpu_custom_call.1} parent=1 // loop_header
      %s11 = sphi 0, %s15
      %p12 = scmp.ge.s32.totalorder %s11, 4
      %s18 = sphi 0, %s30
      %s19 = sphi 0, %s26
      %s20 = sphi 0, %s18
      %s21 = sphi 0, %s19
      %s22 = sphi 0, %s20
      %s23 = sphi 0, %s21
      %s35 = sphi 0, %s37
      %s38 = sphi 0, %s35
      %s39 = sphi 0, %s38
      %s55 = sphi 0, %s39
      %s61 = sphi 0, %s63
      %s64 = sphi 0, %s61
      %s65 = sphi 0, %s64
      %s81 = sphi 0, %s65
      %s89 = sphi 0, %s91
      %s92 = sphi 0, %s89
      %s93 = sphi 0, %s92
      %s109 = sphi 0, %s93
    $region4: #{tpu_custom_call.1} parent=1 // loop_header_branch
      %14 = sbr.rel (%p12) target = $region8
    $region5: #{tpu_custom_call.1} parent=1 // loop_body
      %s16 = ssub.s32 %s11, 1
      %s17 = ssub.s32 %s11, 2
      %s24 = sadd.s32 1, %s19
      %p25 = scmp.ge.s32.totalorder %s24, 1
      %s26 = scalar_select %p25, 0, %s24
      %s27 = sadd.s32 1, %s18
      %s28 = scalar_select %p25, %s27, %s18
      %p29 = scmp.ge.s32.totalorder %s28, 2
      %s30 = scalar_select %p29, 0, %s28
      %s31 = ssub.s32 %s18, %s30
      %s32 = ssub.s32 %s19, %s26
      %s33 = sor.u32 %s31, %s32
      %p34 = scmp.eq.s32.totalorder %s33, 0
      %s36 = sadd.s32 %s35, 1
      %s37 = scalar_select %p34, %s35, %s36
      %p40 = pneg %p34
      %p41 = scmp.eq.s32.totalorder %s11, 1
      %p42 = por %p40, %p41
      %p43 = scmp.ne.s32.totalorder %s35, %s38
      %p44 = scmp.eq.s32.totalorder %s11, 0
      %p45 = por %p43, %p44
      %p46 = scmp.ne.s32.totalorder %s35, %s38
      %p47 = scmp.eq.s32.totalorder %s16, 1
      %p48 = por %p46, %p47
      %p49 = scmp.ne.s32.totalorder %s38, %s39
      %p50 = scmp.eq.s32.totalorder %s16, 0
      %p51 = por %p49, %p50
      %p52 = scmp.ne.s32.totalorder %s38, %s39
      %p53 = scmp.eq.s32.totalorder %s17, 1
      %p54 = por %p52, %p53
      %p56 = scmp.ne.s32.totalorder %s39, %s55
      %p57 = scmp.eq.s32.totalorder %s17, 0
      %p58 = por %p56, %p57
      %s59 = ssub.s32 %s18, %s30
      %p60 = scmp.eq.s32.totalorder %s59, 0
      %s62 = sadd.s32 %s61, 1
      %s63 = scalar_select %p60, %s61, %s62
      %p66 = pneg %p60
      %p67 = scmp.eq.s32.totalorder %s11, 1
      %p68 = por %p66, %p67
      %p69 = scmp.ne.s32.totalorder %s61, %s64
      %p70 = scmp.eq.s32.totalorder %s11, 0
      %p71 = por %p69, %p70
      %p72 = scmp.ne.s32.totalorder %s61, %s64
      %p73 = scmp.eq.s32.totalorder %s16, 1
      %p74 = por %p72, %p73
      %p75 = scmp.ne.s32.totalorder %s64, %s65
      %p76 = scmp.eq.s32.totalorder %s16, 0
      %p77 = por %p75, %p76
      %p78 = scmp.ne.s32.totalorder %s64, %s65
      %p79 = scmp.eq.s32.totalorder %s17, 1
      %p80 = por %p78, %p79
      %p82 = scmp.ne.s32.totalorder %s65, %s81
      %p83 = scmp.eq.s32.totalorder %s17, 0
      %p84 = por %p82, %p83
      %s85 = ssub.s32 %s18, %s30
      %s86 = ssub.s32 %s19, %s26
      %s87 = sor.u32 %s85, %s86
      %p88 = scmp.eq.s32.totalorder %s87, 0
      %s90 = sadd.s32 %s89, 1
      %s91 = scalar_select %p88, %s89, %s90
      %p94 = pneg %p88
      %p95 = scmp.eq.s32.totalorder %s11, 1
      %p96 = por %p94, %p95
      %p97 = scmp.ne.s32.totalorder %s89, %s92
      %p98 = scmp.eq.s32.totalorder %s11, 0
      %p99 = por %p97, %p98
      %p100 = scmp.ne.s32.totalorder %s89, %s92
      %p101 = scmp.eq.s32.totalorder %s16, 1
      %p102 = por %p100, %p101
      %p103 = scmp.ne.s32.totalorder %s92, %s93
      %p104 = scmp.eq.s32.totalorder %s16, 0
      %p105 = por %p103, %p104
      %p106 = scmp.ne.s32.totalorder %s92, %s93
      %p107 = scmp.eq.s32.totalorder %s17, 1
      %p108 = por %p106, %p107
      %p110 = scmp.ne.s32.totalorder %s93, %s109
      %p111 = scmp.eq.s32.totalorder %s17, 0
      %p112 = por %p110, %p111
      %p113 = scmp.le.s32.totalorder 1, %s11
      %p114 = scmp.lt.s32.totalorder %s11, 3
      %p115 = pnand %p113, %p114
      %p116 = pneg %p115
      // Predicated region
      $region9: #{tpu_custom_call.1} parent=5 // pred_check
        _
      $region10: #{tpu_custom_call.1} parent=5 // pred_check_branch
        %118 = sbr.rel (%p115) target = $region12
      $region11: #{tpu_custom_call.1} parent=5 // pred_region
        %s119 = ssub.s32 %s11, 1
        // Predicated region
        $region13: #{tpu_custom_call.1} parent=11 // pred_check
          %p120 = pneg %p77
        $region14: #{tpu_custom_call.1} parent=11 // pred_check_branch
          %122 = sbr.rel (%p120) target = $region16
        $region15: #{tpu_custom_call.1} parent=11 // pred_region
          %p123 = scmp.lt.s32.totalorder %s20, 1
          %s124 = scalar_select %p123, %s20, 1
          %s125 = smul.addr %s124, 8
          %s126 = smul.addr %s125, 4
          %s127 = scalar_lea.vmem %s1, %s126
        $region16: #{tpu_custom_call.1} parent=11 // pred_fallthru
          _
      $region12: #{tpu_custom_call.1} parent=5 // pred_fallthru
        _
      %p128 = scmp.lt.s32.totalorder %s11, 2
      // Predicated region
      $region17: #{tpu_custom_call.1} parent=5 // pred_check
        %p129 = pneg %p128
      $region18: #{tpu_custom_call.1} parent=5 // pred_check_branch
        %131 = sbr.rel (%p129) target = $region20
      $region19: #{tpu_custom_call.1} parent=5 // pred_region
        // Predicated region
        $region21: #{tpu_custom_call.1} parent=19 // pred_check
          %p132 = pneg %p45
        $region22: #{tpu_custom_call.1} parent=19 // pred_check_branch
          %134 = sbr.rel (%p132) target = $region24
        $region23: #{tpu_custom_call.1} parent=19 // pred_region
          %s135 = smul.u32 16, %s19
          %p136 = scmp.lt.s32.totalorder %s18, 1
          %s137 = scalar_select %p136, %s18, 1
          %p138 = scmp.lt.s32.totalorder %s135, 15
          %s139 = scalar_select %p138, %s135, 15
          %s140 = smul.addr %s137, 16
          %s141 = sadd.s32 %s139, %s140
          %s142 = smul.addr %s141, 8
          %s143 = scalar_lea.vmem %s0, %s142
          %s144 = smul.u32 16, %s19
        $region24: #{tpu_custom_call.1} parent=19 // pred_fallthru
          _
      $region20: #{tpu_custom_call.1} parent=5 // pred_fallthru
        _
      %p145 = scmp.le.s32.totalorder 1, %s11
      %p146 = scmp.lt.s32.totalorder %s11, 3
      %p147 = pnand %p145, %p146
      %p148 = pneg %p147
      // Predicated region
      $region25: #{tpu_custom_call.1} parent=5 // pred_check
        _
      $region26: #{tpu_custom_call.1} parent=5 // pred_check_branch
        %150 = sbr.rel (%p147) target = $region28
      $region27: #{tpu_custom_call.1} parent=5 // pred_region
        %s151 = ssub.s32 %s11, 1
        %s152 = smul.u32 16, %s21
        %p153 = scmp.lt.s32.totalorder %s20, 1
        %s154 = scalar_select %p153, %s20, 1
        %p155 = scmp.lt.s32.totalorder %s152, 15
        %s156 = scalar_select %p155, %s152, 15
        %s157 = smul.addr %s154, 16
        %s158 = sadd.s32 %s156, %s157
        %s159 = smul.addr %s158, 8
        %s160 = scalar_lea.vmem %s0, %s159
        %p161 = pneg %p51
        %p162 = pneg %p48
        %p163 = scmp.lt.s32.totalorder %s20, 1
        %s164 = scalar_select %p163, %s20, 1
        %s165 = smul.addr %s164, 8
        %s166 = smul.addr %s165, 4
        %s167 = scalar_lea.vmem %s1, %s166
        %p168 = pneg %p77
        %p169 = pneg %p74
        %p170 = pneg %p105
        %p171 = pneg %p102
        %s172 = sand.u32 %s92, 1
        %s173 = scalar_lea.sflag [#allocation3], %s172
        %s174 = sand.u32 %s92, 1
        %s175 = scalar_lea.vmem [#allocation2], %s174
        %s176 = smul.u32 16, %s21
        %p177 = scmp.lt.s32.totalorder %s20, 1
        %s178 = scalar_select %p177, %s20, 1
        %p179 = scmp.lt.s32.totalorder %s176, 15
        %s180 = scalar_select %p179, %s176, 15
        %s181 = smul.addr %s178, 16
        %s182 = sadd.s32 %s180, %s181
        %s183 = smul.addr %s182, 8
        %s184 = scalar_lea.vmem %s0, %s183
        %s185 = smul.u32 16, %s21
        %p186 = scmp.lt.s32.totalorder %s20, 1
        %s187 = scalar_select %p186, %s20, 1
        %s188 = smul.addr %s187, 8
        %s189 = smul.addr %s188, 4
        %s190 = scalar_lea.vmem %s1, %s189
        %v192 = vld [vmem:[%s184] sm:$0xff]
        %v193 = vld [vmem:[%s184 + $0x8] sm:$0xff]
        %v194 = vld [vmem:[%s184 + $0x10] sm:$0xff]
        %v195 = vld [vmem:[%s184 + $0x18] sm:$0xff]
        %v196 = vld [vmem:[%s184 + $0x20] sm:$0xff]
        %v197 = vld [vmem:[%s184 + $0x28] sm:$0xff]
        %v198 = vld [vmem:[%s184 + $0x30] sm:$0xff]
        %v199 = vld [vmem:[%s184 + $0x38] sm:$0xff]
        %v200 = vld [vmem:[%s184 + $0x40] sm:$0xff]
        %v201 = vld [vmem:[%s184 + $0x48] sm:$0xff]
        %v202 = vld [vmem:[%s184 + $0x50] sm:$0xff]
        %v203 = vld [vmem:[%s184 + $0x58] sm:$0xff]
        %v204 = vld [vmem:[%s184 + $0x60] sm:$0xff]
        %v205 = vld [vmem:[%s184 + $0x68] sm:$0xff]
        %v206 = vld [vmem:[%s184 + $0x70] sm:$0xff]
        %v207 = vld [vmem:[%s184 + $0x78] sm:$0xff]
        %v208 = vmul.f32 %v192, %v192
        %v209 = vmul.f32 %v193, %v193
        %v210 = vmul.f32 %v194, %v194
        %v211 = vmul.f32 %v195, %v195
        %v212 = vmul.f32 %v196, %v196
        %v213 = vmul.f32 %v197, %v197
        %v214 = vmul.f32 %v198, %v198
        %v215 = vmul.f32 %v199, %v199
        %v216 = vmul.f32 %v200, %v200
        %v217 = vmul.f32 %v201, %v201
        %v218 = vmul.f32 %v202, %v202
        %v219 = vmul.f32 %v203, %v203
        %v220 = vmul.f32 %v204, %v204
        %v221 = vmul.f32 %v205, %v205
        %v222 = vmul.f32 %v206, %v206
        %v223 = vmul.f32 %v207, %v207
        %vm224 = vcmask 261120
        %v225 = vsel %vm224, %v208, 0.0
        %226 = vadd.xlane.f32.xlu0 %v225
        %v227 = vpop.xlane.xlu0 %226
        %v228 = vsel %vm224, %v209, 0.0
        %229 = vadd.xlane.f32.xlu0 %v228
        %v230 = vpop.xlane.xlu0 %229
        %v231 = vsel %vm224, %v210, 0.0
        %232 = vadd.xlane.f32.xlu0 %v231
        %v233 = vpop.xlane.xlu0 %232
        %v234 = vsel %vm224, %v211, 0.0
        %235 = vadd.xlane.f32.xlu0 %v234
        %v236 = vpop.xlane.xlu0 %235
        %v237 = vsel %vm224, %v212, 0.0
        %238 = vadd.xlane.f32.xlu0 %v237
        %v239 = vpop.xlane.xlu0 %238
        %v240 = vsel %vm224, %v213, 0.0
        %241 = vadd.xlane.f32.xlu0 %v240
        %v242 = vpop.xlane.xlu0 %241
        %v243 = vsel %vm224, %v214, 0.0
        %244 = vadd.xlane.f32.xlu0 %v243
        %v245 = vpop.xlane.xlu0 %244
        %v246 = vsel %vm224, %v215, 0.0
        %247 = vadd.xlane.f32.xlu0 %v246
        %v248 = vpop.xlane.xlu0 %247
        %v249 = vsel %vm224, %v216, 0.0
        %250 = vadd.xlane.f32.xlu0 %v249
        %v251 = vpop.xlane.xlu0 %250
        %v252 = vsel %vm224, %v217, 0.0
        %253 = vadd.xlane.f32.xlu0 %v252
        %v254 = vpop.xlane.xlu0 %253
        %v255 = vsel %vm224, %v218, 0.0
        %256 = vadd.xlane.f32.xlu0 %v255
        %v257 = vpop.xlane.xlu0 %256
        %v258 = vsel %vm224, %v219, 0.0
        %259 = vadd.xlane.f32.xlu0 %v258
        %v260 = vpop.xlane.xlu0 %259
        %v261 = vsel %vm224, %v220, 0.0
        %262 = vadd.xlane.f32.xlu0 %v261
        %v263 = vpop.xlane.xlu0 %262
        %v264 = vsel %vm224, %v221, 0.0
        %265 = vadd.xlane.f32.xlu0 %v264
        %v266 = vpop.xlane.xlu0 %265
        %v267 = vsel %vm224, %v222, 0.0
        %268 = vadd.xlane.f32.xlu0 %v267
        %v269 = vpop.xlane.xlu0 %268
        %v270 = vsel %vm224, %v223, 0.0
        %271 = vadd.xlane.f32.xlu0 %v270
        %v272 = vpop.xlane.xlu0 %271
        %v273 = vmax.f32 %v227, 1e-24
        %v274 = vmax.f32 %v230, 1e-24
        %v275 = vmax.f32 %v233, 1e-24
        %v276 = vmax.f32 %v236, 1e-24
        %v277 = vmax.f32 %v239, 1e-24
        %v278 = vmax.f32 %v242, 1e-24
        %v279 = vmax.f32 %v245, 1e-24
        %v280 = vmax.f32 %v248, 1e-24
        %v281 = vmax.f32 %v251, 1e-24
        %v282 = vmax.f32 %v254, 1e-24
        %v283 = vmax.f32 %v257, 1e-24
        %v284 = vmax.f32 %v260, 1e-24
        %v285 = vmax.f32 %v263, 1e-24
        %v286 = vmax.f32 %v266, 1e-24
        %v287 = vmax.f32 %v269, 1e-24
        %v288 = vmax.f32 %v272, 1e-24
        %v289 = vrsqrt.pop %v273
        %v290 = vrsqrt.pop %v274
        %v291 = vrsqrt.pop %v275
        %v292 = vrsqrt.pop %v276
        %v293 = vrsqrt.pop %v277
        %v294 = vrsqrt.pop %v278
        %v295 = vrsqrt.pop %v279
        %v296 = vrsqrt.pop %v280
        %v297 = vrsqrt.pop %v281
        %v298 = vrsqrt.pop %v282
        %v299 = vrsqrt.pop %v283
        %v300 = vrsqrt.pop %v284
        %v301 = vrsqrt.pop %v285
        %v302 = vrsqrt.pop %v286
        %v303 = vrsqrt.pop %v287
        %v304 = vrsqrt.pop %v288
        %v305 = vmul.f32 %v192, %v289
        %v306 = vmul.f32 %v193, %v290
        %v307 = vmul.f32 %v194, %v291
        %v308 = vmul.f32 %v195, %v292
        %v309 = vmul.f32 %v196, %v293
        %v310 = vmul.f32 %v197, %v294
        %v311 = vmul.f32 %v198, %v295
        %v312 = vmul.f32 %v199, %v296
        %v313 = vmul.f32 %v200, %v297
        %v314 = vmul.f32 %v201, %v298
        %v315 = vmul.f32 %v202, %v299
        %v316 = vmul.f32 %v203, %v300
        %v317 = vmul.f32 %v204, %v301
        %v318 = vmul.f32 %v205, %v302
        %v319 = vmul.f32 %v206, %v303
        %v320 = vmul.f32 %v207, %v304
        %v321 = vpack.c.bf16 %v306, %v305
        %v322 = vpack.c.bf16 %v308, %v307
        %v323 = vpack.c.bf16 %v310, %v309
        %v324 = vpack.c.bf16 %v312, %v311
        %v325 = vpack.c.bf16 %v314, %v313
        %v326 = vpack.c.bf16 %v316, %v315
        %v327 = vpack.c.bf16 %v318, %v317
        %v328 = vpack.c.bf16 %v320, %v319
        %v329 = vld [vmem:[%s190] sm:$0xf]
        %v330 = vld [vmem:[%s190 + $0x4] sm:$0xf]
        %v331 = vld [vmem:[%s190 + $0x8] sm:$0xf]
        %v332 = vld [vmem:[%s190 + $0xc] sm:$0xf]
        %v333 = vld [vmem:[%s190 + $0x10] sm:$0xf]
        %v334 = vld [vmem:[%s190 + $0x14] sm:$0xf]
        %v335 = vld [vmem:[%s190 + $0x18] sm:$0xf]
        %v336 = vld [vmem:[%s190 + $0x1c] sm:$0xf]
        %v345 = vunpack.c.l.b16 %v329
        %v346 = vunpack.c.l.b16 %v330
        %v347 = vunpack.c.l.b16 %v331
        %v348 = vunpack.c.l.b16 %v332
        %v349 = vunpack.c.l.b16 %v333
        %v350 = vunpack.c.l.b16 %v334
        %v351 = vunpack.c.l.b16 %v335
        %v352 = vunpack.c.l.b16 %v336
        %v353 = vpack.c.b16 %v346, %v345
        %v354 = vpack.c.b16 %v348, %v347
        %v355 = vpack.c.b16 %v350, %v349
        %v356 = vpack.c.b16 %v352, %v351
        %v358 = vsel %vm224, %v321, 0
        %v361 = vsel %vm224, %v322, 0
        %v364 = vsel %vm224, %v323, 0
        %v367 = vsel %vm224, %v324, 0
        %v370 = vsel %vm224, %v325, 0
        %v373 = vsel %vm224, %v326, 0
        %v376 = vsel %vm224, %v327, 0
        %v379 = vsel %vm224, %v328, 0
        %v382 = vsel %vm224, %v353, 0
        %v385 = vsel %vm224, %v354, 0
        %v388 = vsel %vm224, %v355, 0
        %v391 = vsel %vm224, %v356, 0
        %393 = vmatprep.subr.bf16.mxu0 0
        %394 = vmatpush1.bf16.xpose.msra.mxu0 %v382
        %395 = vmatprep.subr.bf16.mxu0 0
        %396 = vmatpush1.bf16.xpose.msra.mxu0 %v385
        %397 = vmatprep.subr.bf16.mxu0 0
        %398 = vmatpush1.bf16.xpose.msra.mxu0 %v388
        %399 = vmatprep.subr.bf16.mxu0 0
        %400 = vmatpush1.bf16.xpose.msra.mxu0 %v391
        %401 = vmatprep.subr.bf16.mxu0 0
        %402 = vmatpush1.bf16.xpose.msra.mxu0 0
        %403 = vmatprep.subr.bf16.mxu0 0
        %404 = vmatpush1.bf16.xpose.msra.mxu0 0
        %405 = vmatprep.subr.bf16.mxu0 0
        %406 = vmatpush1.bf16.xpose.msra.mxu0 0
        %407 = vmatprep.subr.bf16.mxu0 0
        %408 = vmatpush1.bf16.xpose.msra.mxu0 0
        %409 = vmatprep.subr.bf16.mxu0 0
        %410 = vmatpush1.bf16.xpose.msra.mxu0 0
        %411 = vmatprep.subr.bf16.mxu0 0
        %412 = vmatpush1.bf16.xpose.msra.mxu0 0
        %413 = vmatprep.subr.bf16.mxu0 0
        %414 = vmatpush1.bf16.xpose.msra.mxu0 0
        %415 = vmatprep.subr.bf16.mxu0 0
        %416 = vmatpush1.bf16.xpose.msra.mxu0 0
        %417 = vmatprep.subr.bf16.mxu0 0
        %418 = vmatpush1.bf16.xpose.msra.mxu0 0
        %419 = vmatprep.subr.bf16.mxu0 0
        %420 = vmatpush1.bf16.xpose.msra.mxu0 0
        %421 = vmatprep.subr.bf16.mxu0 0
        %422 = vmatpush1.bf16.xpose.msra.mxu0 0
        %423 = vmatprep.subr.bf16.mxu0 0
        %424 = vmatpush1.bf16.xpose.msra.mxu0 0
        %425 = vmatprep.mubr.bf16.mxu0 0
        %426 = vmatmul.mubr.bf16.gmra.mrb[0].mxu0 %v358
        %v427 = vpop.f32.mrb[0].mxu0
        %v428 = vadd.f32 0.0, %v427
        %v429 = vpop.f32.mrb[0].mxu0
        %v430 = vpop.f32.mrb[0].mxu0
        %v431 = vadd.f32 0.0, %v430
        %v432 = vpop.f32.mrb[0].mxu0
        %433 = vmatprep.mubr.bf16.mxu0 0
        %434 = vmatmul.mubr.bf16.gmra.mrb[0].mxu0 %v361
        %v435 = vpop.f32.mrb[0].mxu0
        %v436 = vadd.f32 0.0, %v435
        %v437 = vpop.f32.mrb[0].mxu0
        %v438 = vpop.f32.mrb[0].mxu0
        %v439 = vadd.f32 0.0, %v438
        %v440 = vpop.f32.mrb[0].mxu0
        %441 = vmatprep.mubr.bf16.mxu0 0
        %442 = vmatmul.mubr.bf16.gmra.mrb[0].mxu0 %v364
        %v443 = vpop.f32.mrb[0].mxu0
        %v444 = vadd.f32 0.0, %v443
        %v445 = vpop.f32.mrb[0].mxu0
        %v446 = vpop.f32.mrb[0].mxu0
        %v447 = vadd.f32 0.0, %v446
        %v448 = vpop.f32.mrb[0].mxu0
        %449 = vmatprep.mubr.bf16.mxu0 0
        %450 = vmatmul.mubr.bf16.gmra.mrb[0].mxu0 %v367
        %v451 = vpop.f32.mrb[0].mxu0
        %v452 = vadd.f32 0.0, %v451
        %v453 = vpop.f32.mrb[0].mxu0
        %v454 = vpop.f32.mrb[0].mxu0
        %v455 = vadd.f32 0.0, %v454
        %v456 = vpop.f32.mrb[0].mxu0
        %457 = vmatprep.mubr.bf16.mxu0 0
        %458 = vmatmul.mubr.bf16.gmra.mrb[0].mxu0 %v370
        %v459 = vpop.f32.mrb[0].mxu0
        %v460 = vadd.f32 0.0, %v459
        %v461 = vpop.f32.mrb[0].mxu0
        %v462 = vpop.f32.mrb[0].mxu0
        %v463 = vadd.f32 0.0, %v462
        %v464 = vpop.f32.mrb[0].mxu0
        %465 = vmatprep.mubr.bf16.mxu0 0
        %466 = vmatmul.mubr.bf16.gmra.mrb[0].mxu0 %v373
        %v467 = vpop.f32.mrb[0].mxu0
        %v468 = vadd.f32 0.0, %v467
        %v469 = vpop.f32.mrb[0].mxu0
        %v470 = vpop.f32.mrb[0].mxu0
        %v471 = vadd.f32 0.0, %v470
        %v472 = vpop.f32.mrb[0].mxu0
        %473 = vmatprep.mubr.bf16.mxu0 0
        %474 = vmatmul.mubr.bf16.gmra.mrb[0].mxu0 %v376
        %v475 = vpop.f32.mrb[0].mxu0
        %v476 = vadd.f32 0.0, %v475
        %v477 = vpop.f32.mrb[0].mxu0
        %v478 = vpop.f32.mrb[0].mxu0
        %v479 = vadd.f32 0.0, %v478
        %v480 = vpop.f32.mrb[0].mxu0
        %481 = vmatprep.mubr.bf16.mxu0 0
        %482 = vmatmul.mubr.bf16.gmra.mrb[0].mxu0 %v379
        %v483 = vpop.f32.mrb[0].mxu0
        %v484 = vadd.f32 0.0, %v483
        %v485 = vpop.f32.mrb[0].mxu0
        %v486 = vpop.f32.mrb[0].mxu0
        %v487 = vadd.f32 0.0, %v486
        %v488 = vpop.f32.mrb[0].mxu0
        %489 = vdwg.mxu0
        %vm490 = vcmask 523264
        %v491 = vsel %vm490, %v428, -inf
        %492 = vmax.index.xlane.f32.xlu0 %v491
        %v493 = vpop.xlane.xlu0 %492
        %v494 = vsel %vm490, %v431, -inf
        %495 = vmax.index.xlane.f32.xlu0 %v494
        %v496 = vpop.xlane.xlu0 %495
        %v497 = vsel %vm490, %v436, -inf
        %498 = vmax.index.xlane.f32.xlu0 %v497
        %v499 = vpop.xlane.xlu0 %498
        %v500 = vsel %vm490, %v439, -inf
        %501 = vmax.index.xlane.f32.xlu0 %v500
        %v502 = vpop.xlane.xlu0 %501
        %v503 = vsel %vm490, %v444, -inf
        %504 = vmax.index.xlane.f32.xlu0 %v503
        %v505 = vpop.xlane.xlu0 %504
        %v506 = vsel %vm490, %v447, -inf
        %507 = vmax.index.xlane.f32.xlu0 %v506
        %v508 = vpop.xlane.xlu0 %507
        %v509 = vsel %vm490, %v452, -inf
        %510 = vmax.index.xlane.f32.xlu0 %v509
        %v511 = vpop.xlane.xlu0 %510
        %v512 = vsel %vm490, %v455, -inf
        %513 = vmax.index.xlane.f32.xlu0 %v512
        %v514 = vpop.xlane.xlu0 %513
        %v515 = vsel %vm490, %v460, -inf
        %516 = vmax.index.xlane.f32.xlu0 %v515
        %v517 = vpop.xlane.xlu0 %516
        %v518 = vsel %vm490, %v463, -inf
        %519 = vmax.index.xlane.f32.xlu0 %v518
        %v520 = vpop.xlane.xlu0 %519
        %v521 = vsel %vm490, %v468, -inf
        %522 = vmax.index.xlane.f32.xlu0 %v521
        %v523 = vpop.xlane.xlu0 %522
        %v524 = vsel %vm490, %v471, -inf
        %525 = vmax.index.xlane.f32.xlu0 %v524
        %v526 = vpop.xlane.xlu0 %525
        %v527 = vsel %vm490, %v476, -inf
        %528 = vmax.index.xlane.f32.xlu0 %v527
        %v529 = vpop.xlane.xlu0 %528
        %v530 = vsel %vm490, %v479, -inf
        %531 = vmax.index.xlane.f32.xlu0 %v530
        %v532 = vpop.xlane.xlu0 %531
        %v533 = vsel %vm490, %v484, -inf
        %534 = vmax.index.xlane.f32.xlu0 %v533
        %v535 = vpop.xlane.xlu0 %534
        %v536 = vsel %vm490, %v487, -inf
        %537 = vmax.index.xlane.f32.xlu0 %v536
        %v538 = vpop.xlane.xlu0 %537
        %v539 = vlaneseq
        %v540 = vand.u32 %v539, 127
        %v541 = vlaneseq
        %v542 = vshrl.u32 %v541, 7
        %v543 = vsub.s32 %v540, %v542
        %v544 = vrot.slane %v493, %v543
        %v545 = vadd.s32 %v540, 4294967288
        %v546 = vlaneseq
        %v547 = vshrl.u32 %v546, 7
        %v548 = vsub.s32 %v545, %v547
        %v549 = vrot.slane %v496, %v548
        %vm550 = vcmask 130112
        %v551 = vsel %vm550, %v549, %v544
        %v552 = vadd.s32 %v540, 4294967280
        %v553 = vlaneseq
        %v554 = vshrl.u32 %v553, 7
        %v555 = vsub.s32 %v552, %v554
        %v556 = vrot.slane %v499, %v555
        %vm557 = vcmask 195712
        %v558 = vsel %vm557, %v556, %v551
        %v559 = vadd.s32 %v540, 4294967272
        %v560 = vlaneseq
        %v561 = vshrl.u32 %v560, 7
        %v562 = vsub.s32 %v559, %v561
        %v563 = vrot.slane %v502, %v562
        %vm564 = vcmask 261312
        %v565 = vsel %vm564, %v563, %v558
        %v566 = vadd.s32 %v540, 4294967264
        %v567 = vlaneseq
        %v568 = vshrl.u32 %v567, 7
        %v569 = vsub.s32 %v566, %v568
        %v570 = vrot.slane %v505, %v569
        %vm571 = vcmask 326912
        %v572 = vsel %vm571, %v570, %v565
        %v573 = vadd.s32 %v540, 4294967256
        %v574 = vlaneseq
        %v575 = vshrl.u32 %v574, 7
        %v576 = vsub.s32 %v573, %v575
        %v577 = vrot.slane %v508, %v576
        %vm578 = vcmask 392512
        %v579 = vsel %vm578, %v577, %v572
        %v580 = vadd.s32 %v540, 4294967248
        %v581 = vlaneseq
        %v582 = vshrl.u32 %v581, 7
        %v583 = vsub.s32 %v580, %v582
        %v584 = vrot.slane %v511, %v583
        %vm585 = vcmask 458112
        %v586 = vsel %vm585, %v584, %v579
        %v587 = vadd.s32 %v540, 4294967240
        %v588 = vlaneseq
        %v589 = vshrl.u32 %v588, 7
        %v590 = vsub.s32 %v587, %v589
        %v591 = vrot.slane %v514, %v590
        %vm592 = vcmask 523712
        %v593 = vsel %vm592, %v591, %v586
        %v594 = vadd.s32 %v540, 4294967232
        %v595 = vlaneseq
        %v596 = vshrl.u32 %v595, 7
        %v597 = vsub.s32 %v594, %v596
        %v598 = vrot.slane %v517, %v597
        %vm599 = vcmask 589312
        %v600 = vsel %vm599, %v598, %v593
        %v601 = vadd.s32 %v540, 4294967224
        %v602 = vlaneseq
        %v603 = vshrl.u32 %v602, 7
        %v604 = vsub.s32 %v601, %v603
        %v605 = vrot.slane %v520, %v604
        %vm606 = vcmask 654912
        %v607 = vsel %vm606, %v605, %v600
        %v608 = vadd.s32 %v540, 4294967216
        %v609 = vlaneseq
        %v610 = vshrl.u32 %v609, 7
        %v611 = vsub.s32 %v608, %v610
        %v612 = vrot.slane %v523, %v611
        %vm613 = vcmask 720512
        %v614 = vsel %vm613, %v612, %v607
        %v615 = vadd.s32 %v540, 4294967208
        %v616 = vlaneseq
        %v617 = vshrl.u32 %v616, 7
        %v618 = vsub.s32 %v615, %v617
        %v619 = vrot.slane %v526, %v618
        %vm620 = vcmask 786112
        %v621 = vsel %vm620, %v619, %v614
        %v622 = vadd.s32 %v540, 4294967200
        %v623 = vlaneseq
        %v624 = vshrl.u32 %v623, 7
        %v625 = vsub.s32 %v622, %v624
        %v626 = vrot.slane %v529, %v625
        %vm627 = vcmask 851712
        %v628 = vsel %vm627, %v626, %v621
        %v629 = vadd.s32 %v540, 4294967192
        %v630 = vlaneseq
        %v631 = vshrl.u32 %v630, 7
        %v632 = vsub.s32 %v629, %v631
        %v633 = vrot.slane %v532, %v632
        %vm634 = vcmask 917312
        %v635 = vsel %vm634, %v633, %v628
        %v636 = vadd.s32 %v540, 4294967184
        %v637 = vlaneseq
        %v638 = vshrl.u32 %v637, 7
        %v639 = vsub.s32 %v636, %v638
        %v640 = vrot.slane %v535, %v639
        %vm641 = vcmask 982912
        %v642 = vsel %vm641, %v640, %v635
        %v643 = vadd.s32 %v540, 4294967176
        %v644 = vlaneseq
        %v645 = vshrl.u32 %v644, 7
        %v646 = vsub.s32 %v643, %v645
        %v647 = vrot.slane %v538, %v646
        %vm648 = vcmask 1048512
        %v649 = vsel %vm648, %v647, %v642
        %650 = vst [vmem:[%s175] sm:$0x1] %v649
        %s651 = sand.u32 %s92, 1
        %s652 = scalar_lea.sflag [#allocation3], %s651
        %s653 = sand.u32 %s92, 1
        %s654 = scalar_lea.vmem [#allocation2], %s653
        // Predicated region
        $region29: #{tpu_custom_call.1} parent=27 // pred_check
          %p655 = pneg %p102
        $region30: #{tpu_custom_call.1} parent=27 // pred_check_branch
          %657 = sbr.rel (%p655) target = $region32
        $region31: #{tpu_custom_call.1} parent=27 // pred_region
          %s659 = ssub.s32 16, 16
          %660 = vsyncadd %s652, %s659
          %s661 = sadd.s32 %s21, %s20
          %s662 = smul.addr %s661, 16
          %s663 = scalar_lea.hbm %s2, %s662
          %s665 = sshll.u32 %s654, 4
          %s666 = int_to_ptr.vmem [resolvable:$true] %s665
          %668 = dma.vmem_to_hbm [thread:$0]  %s666, 16, %s663, %s652
        $region32: #{tpu_custom_call.1} parent=27 // pred_fallthru
          _
      $region28: #{tpu_custom_call.1} parent=5 // pred_fallthru
        _
      %p669 = scmp.le.s32.totalorder 2, %s11
      // Predicated region
      $region33: #{tpu_custom_call.1} parent=5 // pred_check
        %p670 = pneg %p669
      $region34: #{tpu_custom_call.1} parent=5 // pred_check_branch
        %672 = sbr.rel (%p670) target = $region36
      $region35: #{tpu_custom_call.1} parent=5 // pred_region
        %s673 = ssub.s32 %s11, 2
        // Predicated region
        $region37: #{tpu_custom_call.1} parent=35 // pred_check
          %p674 = pneg %p108
        $region38: #{tpu_custom_call.1} parent=35 // pred_check_branch
          %676 = sbr.rel (%p674) target = $region40
        $region39: #{tpu_custom_call.1} parent=35 // pred_region
          %s677 = sand.u32 %s93, 1
          %s678 = scalar_lea.sflag [#allocation3], %s677
          %s679 = sand.u32 %s93, 1
          %s680 = scalar_lea.vmem [#allocation2], %s679
          %681 = dma.done %s678, 16
        $region40: #{tpu_custom_call.1} parent=35 // pred_fallthru
          _
      $region36: #{tpu_custom_call.1} parent=5 // pred_fallthru
        _
    $region6: #{tpu_custom_call.1} parent=1 // loop_footer
      %s15 = sadd.s32 1, %s11
    $region7: #{tpu_custom_call.1} parent=1 // loop_footer_branch
      %10 = sbr.rel target = $region3
    $region8: #{tpu_custom_call.1} parent=1 // loop_exit
      _
    %682 = vsyncpa [#allocation3], 1
    %s683 = scalar_lea.sflag [#allocation3], 1
    %684 = vsyncpa %s683, 1

// kernel: tpu_custom_call.1
$region0: #{tpu_custom_call.1}
  #allocation0 [shape = 'u32[]', space=smem, size = 0x4, offset = 0x4, fixed_abs, tag = 'smem constant byte address 0x4 - core index']
  #allocation1 [shape = 'u32[144,128]{1,0:T(1,128)}', space=vmem, size = 0x12000, scoped, tag = 'internal scratch']
  %s0 = inlined_call_operand.vmem [shape: f32[2,128,32], index: 0, kind: input, shape index: {}]
  %s1 = inlined_call_operand.vmem [shape: bf16[2,64,32], index: 1, kind: input, shape index: {}]
  %s2 = inlined_call_operand.hbm [shape: s32[2,1,128], index: 2, kind: output, shape index: {}]
  %s3 = sld [smem:[#allocation0]]
  $region41: #{tpu_custom_call.1} parent=0
    _
  %s5 = ssub.s32 1, %s3
  %s6 = scalar_select 0, %s5, %s3
  $region1: #{tpu_custom_call.1} parent=0
    #allocation2 [shape = 'u8[1024]{0}', space=vmem, size = 0x400, scoped, tag = 'output window, operand 0']
    #allocation3 [shape = 's32[2]{0}', space=sflag, size = 0x8, scoped, tag = 'scoped memory for tpu_custom_call.1']
    %7 = vsyncpa [#allocation3], 0
    %s8 = scalar_lea.sflag [#allocation3], 1
    %9 = vsyncpa %s8, 0
    loop: start=0, step=1, limit=4
    $region2: #{tpu_custom_call.1} parent=1 // loop_pre_header
      _
    $region3: #{tpu_custom_call.1} parent=1 // loop_header
      %s11 = sphi 0, %s15
      %p12 = scmp.ge.s32.totalorder %s11, 4
      %s18 = sphi 0, %s30
      %s19 = sphi 0, %s26
      %s20 = sphi 0, %s18
      %s21 = sphi 0, %s19
      %s22 = sphi 0, %s20
      %s23 = sphi 0, %s21
      %s35 = sphi 0, %s37
      %s38 = sphi 0, %s35
      %s39 = sphi 0, %s38
      %s55 = sphi 0, %s39
      %s61 = sphi 0, %s63
      %s64 = sphi 0, %s61
      %s65 = sphi 0, %s64
      %s81 = sphi 0, %s65
      %s89 = sphi 0, %s91
      %s92 = sphi 0, %s89
      %s93 = sphi 0, %s92
      %s109 = sphi 0, %s93
    $region4: #{tpu_custom_call.1} parent=1 // loop_header_branch
      %14 = sbr.rel (%p12) target = $region8
    $region5: #{tpu_custom_call.1} parent=1 // loop_body
      %s16 = ssub.s32 %s11, 1
      %s17 = ssub.s32 %s11, 2
      %s24 = sadd.s32 1, %s19
      %p25 = scmp.ge.s32.totalorder %s24, 1
      %s26 = scalar_select %p25, 0, %s24
      %s27 = sadd.s32 1, %s18
      %s28 = scalar_select %p25, %s27, %s18
      %p29 = scmp.ge.s32.totalorder %s28, 2
      %s30 = scalar_select %p29, 0, %s28
      %s31 = ssub.s32 %s18, %s30
      %s32 = ssub.s32 %s19, %s26
      %s33 = sor.u32 %s31, %s32
      %p34 = scmp.eq.s32.totalorder %s33, 0
      %s36 = sadd.s32 %s35, 1
      %s37 = scalar_select %p34, %s35, %s36
      %p40 = pneg %p34
      %p41 = scmp.eq.s32.totalorder %s11, 1
      %p42 = por %p40, %p41
      %p43 = scmp.ne.s32.totalorder %s35, %s38
      %p44 = scmp.eq.s32.totalorder %s11, 0
      %p45 = por %p43, %p44
      %p46 = scmp.ne.s32.totalorder %s35, %s38
      %p47 = scmp.eq.s32.totalorder %s16, 1
      %p48 = por %p46, %p47
      %p49 = scmp.ne.s32.totalorder %s38, %s39
      %p50 = scmp.eq.s32.totalorder %s16, 0
      %p51 = por %p49, %p50
      %p52 = scmp.ne.s32.totalorder %s38, %s39
      %p53 = scmp.eq.s32.totalorder %s17, 1
      %p54 = por %p52, %p53
      %p56 = scmp.ne.s32.totalorder %s39, %s55
      %p57 = scmp.eq.s32.totalorder %s17, 0
      %p58 = por %p56, %p57
      %s59 = ssub.s32 %s18, %s30
      %p60 = scmp.eq.s32.totalorder %s59, 0
      %s62 = sadd.s32 %s61, 1
      %s63 = scalar_select %p60, %s61, %s62
      %p66 = pneg %p60
      %p67 = scmp.eq.s32.totalorder %s11, 1
      %p68 = por %p66, %p67
      %p69 = scmp.ne.s32.totalorder %s61, %s64
      %p70 = scmp.eq.s32.totalorder %s11, 0
      %p71 = por %p69, %p70
      %p72 = scmp.ne.s32.totalorder %s61, %s64
      %p73 = scmp.eq.s32.totalorder %s16, 1
      %p74 = por %p72, %p73
      %p75 = scmp.ne.s32.totalorder %s64, %s65
      %p76 = scmp.eq.s32.totalorder %s16, 0
      %p77 = por %p75, %p76
      %p78 = scmp.ne.s32.totalorder %s64, %s65
      %p79 = scmp.eq.s32.totalorder %s17, 1
      %p80 = por %p78, %p79
      %p82 = scmp.ne.s32.totalorder %s65, %s81
      %p83 = scmp.eq.s32.totalorder %s17, 0
      %p84 = por %p82, %p83
      %s85 = ssub.s32 %s18, %s30
      %s86 = ssub.s32 %s19, %s26
      %s87 = sor.u32 %s85, %s86
      %p88 = scmp.eq.s32.totalorder %s87, 0
      %s90 = sadd.s32 %s89, 1
      %s91 = scalar_select %p88, %s89, %s90
      %p94 = pneg %p88
      %p95 = scmp.eq.s32.totalorder %s11, 1
      %p96 = por %p94, %p95
      %p97 = scmp.ne.s32.totalorder %s89, %s92
      %p98 = scmp.eq.s32.totalorder %s11, 0
      %p99 = por %p97, %p98
      %p100 = scmp.ne.s32.totalorder %s89, %s92
      %p101 = scmp.eq.s32.totalorder %s16, 1
      %p102 = por %p100, %p101
      %p103 = scmp.ne.s32.totalorder %s92, %s93
      %p104 = scmp.eq.s32.totalorder %s16, 0
      %p105 = por %p103, %p104
      %p106 = scmp.ne.s32.totalorder %s92, %s93
      %p107 = scmp.eq.s32.totalorder %s17, 1
      %p108 = por %p106, %p107
      %p110 = scmp.ne.s32.totalorder %s93, %s109
      %p111 = scmp.eq.s32.totalorder %s17, 0
      %p112 = por %p110, %p111
      %p113 = scmp.le.s32.totalorder 1, %s11
      %p114 = scmp.lt.s32.totalorder %s11, 3
      %p115 = pnand %p113, %p114
      %p116 = pneg %p115
      // Predicated region
      $region9: #{tpu_custom_call.1} parent=5 // pred_check
        _
      $region10: #{tpu_custom_call.1} parent=5 // pred_check_branch
        %118 = sbr.rel (%p115) target = $region12
      $region11: #{tpu_custom_call.1} parent=5 // pred_region
        %s119 = ssub.s32 %s11, 1
      $region12: #{tpu_custom_call.1} parent=5 // pred_fallthru
        _
      %p120 = scmp.lt.s32.totalorder %s11, 2
      // Predicated region
      $region13: #{tpu_custom_call.1} parent=5 // pred_check
        %p121 = pneg %p120
      $region14: #{tpu_custom_call.1} parent=5 // pred_check_branch
        %123 = sbr.rel (%p121) target = $region16
      $region15: #{tpu_custom_call.1} parent=5 // pred_region
        // Predicated region
        $region17: #{tpu_custom_call.1} parent=15 // pred_check
          %p124 = pneg %p45
        $region18: #{tpu_custom_call.1} parent=15 // pred_check_branch
          %126 = sbr.rel (%p124) target = $region20
        $region19: #{tpu_custom_call.1} parent=15 // pred_region
          %s127 = smul.u32 16, %s19
          %p128 = scmp.lt.s32.totalorder %s18, 1
          %s129 = scalar_select %p128, %s18, 1
          %p130 = scmp.lt.s32.totalorder %s127, 15
          %s131 = scalar_select %p130, %s127, 15
          %s132 = smul.addr %s129, 16
          %s133 = sadd.s32 %s131, %s132
          %s134 = smul.addr %s133, 8
          %s135 = scalar_lea.vmem %s0, %s134
          %s136 = smul.u32 16, %s19
        $region20: #{tpu_custom_call.1} parent=15 // pred_fallthru
          _
        // Predicated region
        $region21: #{tpu_custom_call.1} parent=15 // pred_check
          %p137 = pneg %p71
        $region22: #{tpu_custom_call.1} parent=15 // pred_check_branch
          %139 = sbr.rel (%p137) target = $region24
        $region23: #{tpu_custom_call.1} parent=15 // pred_region
          %p140 = scmp.lt.s32.totalorder %s18, 1
          %s141 = scalar_select %p140, %s18, 1
          %s142 = smul.addr %s141, 8
          %s143 = smul.addr %s142, 4
          %s144 = scalar_lea.vmem %s1, %s143
        $region24: #{tpu_custom_call.1} parent=15 // pred_fallthru
          _
      $region16: #{tpu_custom_call.1} parent=5 // pred_fallthru
        _
      %p145 = scmp.le.s32.totalorder 1, %s11
      %p146 = scmp.lt.s32.totalorder %s11, 3
      %p147 = pnand %p145, %p146
      %p148 = pneg %p147
      // Predicated region
      $region25: #{tpu_custom_call.1} parent=5 // pred_check
        _
      $region26: #{tpu_custom_call.1} parent=5 // pred_check_branch
        %150 = sbr.rel (%p147) target = $region28
      $region27: #{tpu_custom_call.1} parent=5 // pred_region
        %s151 = ssub.s32 %s11, 1
        %s152 = smul.u32 16, %s21
        %p153 = scmp.lt.s32.totalorder %s20, 1
        %s154 = scalar_select %p153, %s20, 1
        %p155 = scmp.lt.s32.totalorder %s152, 15
        %s156 = scalar_select %p155, %s152, 15
        %s157 = smul.addr %s154, 16
        %s158 = sadd.s32 %s156, %s157
        %s159 = smul.addr %s158, 8
        %s160 = scalar_lea.vmem %s0, %s159
        %p161 = pneg %p51
        %p162 = pneg %p48
        %p163 = scmp.lt.s32.totalorder %s20, 1
        %s164 = scalar_select %p163, %s20, 1
        %s165 = smul.addr %s164, 8
        %s166 = smul.addr %s165, 4
        %s167 = scalar_lea.vmem %s1, %s166
        %p168 = pneg %p77
        %p169 = pneg %p74
        %p170 = pneg %p105
        %p171 = pneg %p102
        %s172 = sand.u32 %s92, 1
        %s173 = scalar_lea.sflag [#allocation3], %s172
        %s174 = sand.u32 %s92, 1
        %s175 = scalar_lea.vmem [#allocation2], %s174
        %s176 = smul.u32 16, %s21
        %p177 = scmp.lt.s32.totalorder %s20, 1
        %s178 = scalar_select %p177, %s20, 1
        %p179 = scmp.lt.s32.totalorder %s176, 15
        %s180 = scalar_select %p179, %s176, 15
        %s181 = smul.addr %s178, 16
        %s182 = sadd.s32 %s180, %s181
        %s183 = smul.addr %s182, 8
        %s184 = scalar_lea.vmem %s0, %s183
        %s185 = smul.u32 16, %s21
        %p186 = scmp.lt.s32.totalorder %s20, 1
        %s187 = scalar_select %p186, %s20, 1
        %s188 = smul.addr %s187, 8
        %s189 = smul.addr %s188, 4
        %s190 = scalar_lea.vmem %s1, %s189
        %v192 = vld [vmem:[%s184] sm:$0xff]
        %v193 = vld [vmem:[%s184 + $0x8] sm:$0xff]
        %v194 = vld [vmem:[%s184 + $0x10] sm:$0xff]
        %v195 = vld [vmem:[%s184 + $0x18] sm:$0xff]
        %v196 = vld [vmem:[%s184 + $0x20] sm:$0xff]
        %v197 = vld [vmem:[%s184 + $0x28] sm:$0xff]
        %v198 = vld [vmem:[%s184 + $0x30] sm:$0xff]
        %v199 = vld [vmem:[%s184 + $0x38] sm:$0xff]
        %v200 = vld [vmem:[%s184 + $0x40] sm:$0xff]
        %v201 = vld [vmem:[%s184 + $0x48] sm:$0xff]
        %v202 = vld [vmem:[%s184 + $0x50] sm:$0xff]
        %v203 = vld [vmem:[%s184 + $0x58] sm:$0xff]
        %v204 = vld [vmem:[%s184 + $0x60] sm:$0xff]
        %v205 = vld [vmem:[%s184 + $0x68] sm:$0xff]
        %v206 = vld [vmem:[%s184 + $0x70] sm:$0xff]
        %v207 = vld [vmem:[%s184 + $0x78] sm:$0xff]
        %v208 = vmul.f32 %v192, %v192
        %v209 = vmul.f32 %v193, %v193
        %v210 = vmul.f32 %v194, %v194
        %v211 = vmul.f32 %v195, %v195
        %v212 = vmul.f32 %v196, %v196
        %v213 = vmul.f32 %v197, %v197
        %v214 = vmul.f32 %v198, %v198
        %v215 = vmul.f32 %v199, %v199
        %v216 = vmul.f32 %v200, %v200
        %v217 = vmul.f32 %v201, %v201
        %v218 = vmul.f32 %v202, %v202
        %v219 = vmul.f32 %v203, %v203
        %v220 = vmul.f32 %v204, %v204
        %v221 = vmul.f32 %v205, %v205
        %v222 = vmul.f32 %v206, %v206
        %v223 = vmul.f32 %v207, %v207
        %vm224 = vcmask 261120
        %v225 = vsel %vm224, %v208, 0.0
        %226 = vadd.xlane.f32.xlu0 %v225
        %v227 = vpop.xlane.xlu0 %226
        %v228 = vsel %vm224, %v209, 0.0
        %229 = vadd.xlane.f32.xlu0 %v228
        %v230 = vpop.xlane.xlu0 %229
        %v231 = vsel %vm224, %v210, 0.0
        %232 = vadd.xlane.f32.xlu0 %v231
        %v233 = vpop.xlane.xlu0 %232
        %v234 = vsel %vm224, %v211, 0.0
        %235 = vadd.xlane.f32.xlu0 %v234
        %v236 = vpop.xlane.xlu0 %235
        %v237 = vsel %vm224, %v212, 0.0
        %238 = vadd.xlane.f32.xlu0 %v237
        %v239 = vpop.xlane.xlu0 %238
        %v240 = vsel %vm224, %v213, 0.0
        %241 = vadd.xlane.f32.xlu0 %v240
        %v242 = vpop.xlane.xlu0 %241
        %v243 = vsel %vm224, %v214, 0.0
        %244 = vadd.xlane.f32.xlu0 %v243
        %v245 = vpop.xlane.xlu0 %244
        %v246 = vsel %vm224, %v215, 0.0
        %247 = vadd.xlane.f32.xlu0 %v246
        %v248 = vpop.xlane.xlu0 %247
        %v249 = vsel %vm224, %v216, 0.0
        %250 = vadd.xlane.f32.xlu0 %v249
        %v251 = vpop.xlane.xlu0 %250
        %v252 = vsel %vm224, %v217, 0.0
        %253 = vadd.xlane.f32.xlu0 %v252
        %v254 = vpop.xlane.xlu0 %253
        %v255 = vsel %vm224, %v218, 0.0
        %256 = vadd.xlane.f32.xlu0 %v255
        %v257 = vpop.xlane.xlu0 %256
        %v258 = vsel %vm224, %v219, 0.0
        %259 = vadd.xlane.f32.xlu0 %v258
        %v260 = vpop.xlane.xlu0 %259
        %v261 = vsel %vm224, %v220, 0.0
        %262 = vadd.xlane.f32.xlu0 %v261
        %v263 = vpop.xlane.xlu0 %262
        %v264 = vsel %vm224, %v221, 0.0
        %265 = vadd.xlane.f32.xlu0 %v264
        %v266 = vpop.xlane.xlu0 %265
        %v267 = vsel %vm224, %v222, 0.0
        %268 = vadd.xlane.f32.xlu0 %v267
        %v269 = vpop.xlane.xlu0 %268
        %v270 = vsel %vm224, %v223, 0.0
        %271 = vadd.xlane.f32.xlu0 %v270
        %v272 = vpop.xlane.xlu0 %271
        %v273 = vmax.f32 %v227, 1e-24
        %v274 = vmax.f32 %v230, 1e-24
        %v275 = vmax.f32 %v233, 1e-24
        %v276 = vmax.f32 %v236, 1e-24
        %v277 = vmax.f32 %v239, 1e-24
        %v278 = vmax.f32 %v242, 1e-24
        %v279 = vmax.f32 %v245, 1e-24
        %v280 = vmax.f32 %v248, 1e-24
        %v281 = vmax.f32 %v251, 1e-24
        %v282 = vmax.f32 %v254, 1e-24
        %v283 = vmax.f32 %v257, 1e-24
        %v284 = vmax.f32 %v260, 1e-24
        %v285 = vmax.f32 %v263, 1e-24
        %v286 = vmax.f32 %v266, 1e-24
        %v287 = vmax.f32 %v269, 1e-24
        %v288 = vmax.f32 %v272, 1e-24
        %v289 = vrsqrt.pop %v273
        %v290 = vrsqrt.pop %v274
        %v291 = vrsqrt.pop %v275
        %v292 = vrsqrt.pop %v276
        %v293 = vrsqrt.pop %v277
        %v294 = vrsqrt.pop %v278
        %v295 = vrsqrt.pop %v279
        %v296 = vrsqrt.pop %v280
        %v297 = vrsqrt.pop %v281
        %v298 = vrsqrt.pop %v282
        %v299 = vrsqrt.pop %v283
        %v300 = vrsqrt.pop %v284
        %v301 = vrsqrt.pop %v285
        %v302 = vrsqrt.pop %v286
        %v303 = vrsqrt.pop %v287
        %v304 = vrsqrt.pop %v288
        %v305 = vmul.f32 %v192, %v289
        %v306 = vmul.f32 %v193, %v290
        %v307 = vmul.f32 %v194, %v291
        %v308 = vmul.f32 %v195, %v292
        %v309 = vmul.f32 %v196, %v293
        %v310 = vmul.f32 %v197, %v294
        %v311 = vmul.f32 %v198, %v295
        %v312 = vmul.f32 %v199, %v296
        %v313 = vmul.f32 %v200, %v297
        %v314 = vmul.f32 %v201, %v298
        %v315 = vmul.f32 %v202, %v299
        %v316 = vmul.f32 %v203, %v300
        %v317 = vmul.f32 %v204, %v301
        %v318 = vmul.f32 %v205, %v302
        %v319 = vmul.f32 %v206, %v303
        %v320 = vmul.f32 %v207, %v304
        %v321 = vpack.c.bf16 %v306, %v305
        %v322 = vpack.c.bf16 %v308, %v307
        %v323 = vpack.c.bf16 %v310, %v309
        %v324 = vpack.c.bf16 %v312, %v311
        %v325 = vpack.c.bf16 %v314, %v313
        %v326 = vpack.c.bf16 %v316, %v315
        %v327 = vpack.c.bf16 %v318, %v317
        %v328 = vpack.c.bf16 %v320, %v319
        %v329 = vld [vmem:[%s190] sm:$0xf]
        %v330 = vld [vmem:[%s190 + $0x4] sm:$0xf]
        %v331 = vld [vmem:[%s190 + $0x8] sm:$0xf]
        %v332 = vld [vmem:[%s190 + $0xc] sm:$0xf]
        %v333 = vld [vmem:[%s190 + $0x10] sm:$0xf]
        %v334 = vld [vmem:[%s190 + $0x14] sm:$0xf]
        %v335 = vld [vmem:[%s190 + $0x18] sm:$0xf]
        %v336 = vld [vmem:[%s190 + $0x1c] sm:$0xf]
        %v345 = vunpack.c.l.b16 %v329
        %v346 = vunpack.c.l.b16 %v330
        %v347 = vunpack.c.l.b16 %v331
        %v348 = vunpack.c.l.b16 %v332
        %v349 = vunpack.c.l.b16 %v333
        %v350 = vunpack.c.l.b16 %v334
        %v351 = vunpack.c.l.b16 %v335
        %v352 = vunpack.c.l.b16 %v336
        %v353 = vpack.c.b16 %v346, %v345
        %v354 = vpack.c.b16 %v348, %v347
        %v355 = vpack.c.b16 %v350, %v349
        %v356 = vpack.c.b16 %v352, %v351
        %v358 = vsel %vm224, %v321, 0
        %v361 = vsel %vm224, %v322, 0
        %v364 = vsel %vm224, %v323, 0
        %v367 = vsel %vm224, %v324, 0
        %v370 = vsel %vm224, %v325, 0
        %v373 = vsel %vm224, %v326, 0
        %v376 = vsel %vm224, %v327, 0
        %v379 = vsel %vm224, %v328, 0
        %v382 = vsel %vm224, %v353, 0
        %v385 = vsel %vm224, %v354, 0
        %v388 = vsel %vm224, %v355, 0
        %v391 = vsel %vm224, %v356, 0
        %393 = vmatprep.subr.bf16.mxu0 0
        %394 = vmatpush1.bf16.xpose.msra.mxu0 %v382
        %395 = vmatprep.subr.bf16.mxu0 0
        %396 = vmatpush1.bf16.xpose.msra.mxu0 %v385
        %397 = vmatprep.subr.bf16.mxu0 0
        %398 = vmatpush1.bf16.xpose.msra.mxu0 %v388
        %399 = vmatprep.subr.bf16.mxu0 0
        %400 = vmatpush1.bf16.xpose.msra.mxu0 %v391
        %401 = vmatprep.subr.bf16.mxu0 0
        %402 = vmatpush1.bf16.xpose.msra.mxu0 0
        %403 = vmatprep.subr.bf16.mxu0 0
        %404 = vmatpush1.bf16.xpose.msra.mxu0 0
        %405 = vmatprep.subr.bf16.mxu0 0
        %406 = vmatpush1.bf16.xpose.msra.mxu0 0
        %407 = vmatprep.subr.bf16.mxu0 0
        %408 = vmatpush1.bf16.xpose.msra.mxu0 0
        %409 = vmatprep.subr.bf16.mxu0 0
        %410 = vmatpush1.bf16.xpose.msra.mxu0 0
        %411 = vmatprep.subr.bf16.mxu0 0
        %412 = vmatpush1.bf16.xpose.msra.mxu0 0
        %413 = vmatprep.subr.bf16.mxu0 0
        %414 = vmatpush1.bf16.xpose.msra.mxu0 0
        %415 = vmatprep.subr.bf16.mxu0 0
        %416 = vmatpush1.bf16.xpose.msra.mxu0 0
        %417 = vmatprep.subr.bf16.mxu0 0
        %418 = vmatpush1.bf16.xpose.msra.mxu0 0
        %419 = vmatprep.subr.bf16.mxu0 0
        %420 = vmatpush1.bf16.xpose.msra.mxu0 0
        %421 = vmatprep.subr.bf16.mxu0 0
        %422 = vmatpush1.bf16.xpose.msra.mxu0 0
        %423 = vmatprep.subr.bf16.mxu0 0
        %424 = vmatpush1.bf16.xpose.msra.mxu0 0
        %425 = vmatprep.mubr.bf16.mxu0 0
        %426 = vmatmul.mubr.bf16.gmra.mrb[0].mxu0 %v358
        %v427 = vpop.f32.mrb[0].mxu0
        %v428 = vadd.f32 0.0, %v427
        %v429 = vpop.f32.mrb[0].mxu0
        %v430 = vpop.f32.mrb[0].mxu0
        %v431 = vadd.f32 0.0, %v430
        %v432 = vpop.f32.mrb[0].mxu0
        %433 = vmatprep.mubr.bf16.mxu0 0
        %434 = vmatmul.mubr.bf16.gmra.mrb[0].mxu0 %v361
        %v435 = vpop.f32.mrb[0].mxu0
        %v436 = vadd.f32 0.0, %v435
        %v437 = vpop.f32.mrb[0].mxu0
        %v438 = vpop.f32.mrb[0].mxu0
        %v439 = vadd.f32 0.0, %v438
        %v440 = vpop.f32.mrb[0].mxu0
        %441 = vmatprep.mubr.bf16.mxu0 0
        %442 = vmatmul.mubr.bf16.gmra.mrb[0].mxu0 %v364
        %v443 = vpop.f32.mrb[0].mxu0
        %v444 = vadd.f32 0.0, %v443
        %v445 = vpop.f32.mrb[0].mxu0
        %v446 = vpop.f32.mrb[0].mxu0
        %v447 = vadd.f32 0.0, %v446
        %v448 = vpop.f32.mrb[0].mxu0
        %449 = vmatprep.mubr.bf16.mxu0 0
        %450 = vmatmul.mubr.bf16.gmra.mrb[0].mxu0 %v367
        %v451 = vpop.f32.mrb[0].mxu0
        %v452 = vadd.f32 0.0, %v451
        %v453 = vpop.f32.mrb[0].mxu0
        %v454 = vpop.f32.mrb[0].mxu0
        %v455 = vadd.f32 0.0, %v454
        %v456 = vpop.f32.mrb[0].mxu0
        %457 = vmatprep.mubr.bf16.mxu0 0
        %458 = vmatmul.mubr.bf16.gmra.mrb[0].mxu0 %v370
        %v459 = vpop.f32.mrb[0].mxu0
        %v460 = vadd.f32 0.0, %v459
        %v461 = vpop.f32.mrb[0].mxu0
        %v462 = vpop.f32.mrb[0].mxu0
        %v463 = vadd.f32 0.0, %v462
        %v464 = vpop.f32.mrb[0].mxu0
        %465 = vmatprep.mubr.bf16.mxu0 0
        %466 = vmatmul.mubr.bf16.gmra.mrb[0].mxu0 %v373
        %v467 = vpop.f32.mrb[0].mxu0
        %v468 = vadd.f32 0.0, %v467
        %v469 = vpop.f32.mrb[0].mxu0
        %v470 = vpop.f32.mrb[0].mxu0
        %v471 = vadd.f32 0.0, %v470
        %v472 = vpop.f32.mrb[0].mxu0
        %473 = vmatprep.mubr.bf16.mxu0 0
        %474 = vmatmul.mubr.bf16.gmra.mrb[0].mxu0 %v376
        %v475 = vpop.f32.mrb[0].mxu0
        %v476 = vadd.f32 0.0, %v475
        %v477 = vpop.f32.mrb[0].mxu0
        %v478 = vpop.f32.mrb[0].mxu0
        %v479 = vadd.f32 0.0, %v478
        %v480 = vpop.f32.mrb[0].mxu0
        %481 = vmatprep.mubr.bf16.mxu0 0
        %482 = vmatmul.mubr.bf16.gmra.mrb[0].mxu0 %v379
        %v483 = vpop.f32.mrb[0].mxu0
        %v484 = vadd.f32 0.0, %v483
        %v485 = vpop.f32.mrb[0].mxu0
        %v486 = vpop.f32.mrb[0].mxu0
        %v487 = vadd.f32 0.0, %v486
        %v488 = vpop.f32.mrb[0].mxu0
        %489 = vdwg.mxu0
        %vm490 = vcmask 523264
        %v491 = vsel %vm490, %v428, -inf
        %492 = vmax.index.xlane.f32.xlu0 %v491
        %v493 = vpop.xlane.xlu0 %492
        %v494 = vsel %vm490, %v431, -inf
        %495 = vmax.index.xlane.f32.xlu0 %v494
        %v496 = vpop.xlane.xlu0 %495
        %v497 = vsel %vm490, %v436, -inf
        %498 = vmax.index.xlane.f32.xlu0 %v497
        %v499 = vpop.xlane.xlu0 %498
        %v500 = vsel %vm490, %v439, -inf
        %501 = vmax.index.xlane.f32.xlu0 %v500
        %v502 = vpop.xlane.xlu0 %501
        %v503 = vsel %vm490, %v444, -inf
        %504 = vmax.index.xlane.f32.xlu0 %v503
        %v505 = vpop.xlane.xlu0 %504
        %v506 = vsel %vm490, %v447, -inf
        %507 = vmax.index.xlane.f32.xlu0 %v506
        %v508 = vpop.xlane.xlu0 %507
        %v509 = vsel %vm490, %v452, -inf
        %510 = vmax.index.xlane.f32.xlu0 %v509
        %v511 = vpop.xlane.xlu0 %510
        %v512 = vsel %vm490, %v455, -inf
        %513 = vmax.index.xlane.f32.xlu0 %v512
        %v514 = vpop.xlane.xlu0 %513
        %v515 = vsel %vm490, %v460, -inf
        %516 = vmax.index.xlane.f32.xlu0 %v515
        %v517 = vpop.xlane.xlu0 %516
        %v518 = vsel %vm490, %v463, -inf
        %519 = vmax.index.xlane.f32.xlu0 %v518
        %v520 = vpop.xlane.xlu0 %519
        %v521 = vsel %vm490, %v468, -inf
        %522 = vmax.index.xlane.f32.xlu0 %v521
        %v523 = vpop.xlane.xlu0 %522
        %v524 = vsel %vm490, %v471, -inf
        %525 = vmax.index.xlane.f32.xlu0 %v524
        %v526 = vpop.xlane.xlu0 %525
        %v527 = vsel %vm490, %v476, -inf
        %528 = vmax.index.xlane.f32.xlu0 %v527
        %v529 = vpop.xlane.xlu0 %528
        %v530 = vsel %vm490, %v479, -inf
        %531 = vmax.index.xlane.f32.xlu0 %v530
        %v532 = vpop.xlane.xlu0 %531
        %v533 = vsel %vm490, %v484, -inf
        %534 = vmax.index.xlane.f32.xlu0 %v533
        %v535 = vpop.xlane.xlu0 %534
        %v536 = vsel %vm490, %v487, -inf
        %537 = vmax.index.xlane.f32.xlu0 %v536
        %v538 = vpop.xlane.xlu0 %537
        %v539 = vlaneseq
        %v540 = vand.u32 %v539, 127
        %v541 = vlaneseq
        %v542 = vshrl.u32 %v541, 7
        %v543 = vsub.s32 %v540, %v542
        %v544 = vrot.slane %v493, %v543
        %v545 = vadd.s32 %v540, 4294967288
        %v546 = vlaneseq
        %v547 = vshrl.u32 %v546, 7
        %v548 = vsub.s32 %v545, %v547
        %v549 = vrot.slane %v496, %v548
        %vm550 = vcmask 130112
        %v551 = vsel %vm550, %v549, %v544
        %v552 = vadd.s32 %v540, 4294967280
        %v553 = vlaneseq
        %v554 = vshrl.u32 %v553, 7
        %v555 = vsub.s32 %v552, %v554
        %v556 = vrot.slane %v499, %v555
        %vm557 = vcmask 195712
        %v558 = vsel %vm557, %v556, %v551
        %v559 = vadd.s32 %v540, 4294967272
        %v560 = vlaneseq
        %v561 = vshrl.u32 %v560, 7
        %v562 = vsub.s32 %v559, %v561
        %v563 = vrot.slane %v502, %v562
        %vm564 = vcmask 261312
        %v565 = vsel %vm564, %v563, %v558
        %v566 = vadd.s32 %v540, 4294967264
        %v567 = vlaneseq
        %v568 = vshrl.u32 %v567, 7
        %v569 = vsub.s32 %v566, %v568
        %v570 = vrot.slane %v505, %v569
        %vm571 = vcmask 326912
        %v572 = vsel %vm571, %v570, %v565
        %v573 = vadd.s32 %v540, 4294967256
        %v574 = vlaneseq
        %v575 = vshrl.u32 %v574, 7
        %v576 = vsub.s32 %v573, %v575
        %v577 = vrot.slane %v508, %v576
        %vm578 = vcmask 392512
        %v579 = vsel %vm578, %v577, %v572
        %v580 = vadd.s32 %v540, 4294967248
        %v581 = vlaneseq
        %v582 = vshrl.u32 %v581, 7
        %v583 = vsub.s32 %v580, %v582
        %v584 = vrot.slane %v511, %v583
        %vm585 = vcmask 458112
        %v586 = vsel %vm585, %v584, %v579
        %v587 = vadd.s32 %v540, 4294967240
        %v588 = vlaneseq
        %v589 = vshrl.u32 %v588, 7
        %v590 = vsub.s32 %v587, %v589
        %v591 = vrot.slane %v514, %v590
        %vm592 = vcmask 523712
        %v593 = vsel %vm592, %v591, %v586
        %v594 = vadd.s32 %v540, 4294967232
        %v595 = vlaneseq
        %v596 = vshrl.u32 %v595, 7
        %v597 = vsub.s32 %v594, %v596
        %v598 = vrot.slane %v517, %v597
        %vm599 = vcmask 589312
        %v600 = vsel %vm599, %v598, %v593
        %v601 = vadd.s32 %v540, 4294967224
        %v602 = vlaneseq
        %v603 = vshrl.u32 %v602, 7
        %v604 = vsub.s32 %v601, %v603
        %v605 = vrot.slane %v520, %v604
        %vm606 = vcmask 654912
        %v607 = vsel %vm606, %v605, %v600
        %v608 = vadd.s32 %v540, 4294967216
        %v609 = vlaneseq
        %v610 = vshrl.u32 %v609, 7
        %v611 = vsub.s32 %v608, %v610
        %v612 = vrot.slane %v523, %v611
        %vm613 = vcmask 720512
        %v614 = vsel %vm613, %v612, %v607
        %v615 = vadd.s32 %v540, 4294967208
        %v616 = vlaneseq
        %v617 = vshrl.u32 %v616, 7
        %v618 = vsub.s32 %v615, %v617
        %v619 = vrot.slane %v526, %v618
        %vm620 = vcmask 786112
        %v621 = vsel %vm620, %v619, %v614
        %v622 = vadd.s32 %v540, 4294967200
        %v623 = vlaneseq
        %v624 = vshrl.u32 %v623, 7
        %v625 = vsub.s32 %v622, %v624
        %v626 = vrot.slane %v529, %v625
        %vm627 = vcmask 851712
        %v628 = vsel %vm627, %v626, %v621
        %v629 = vadd.s32 %v540, 4294967192
        %v630 = vlaneseq
        %v631 = vshrl.u32 %v630, 7
        %v632 = vsub.s32 %v629, %v631
        %v633 = vrot.slane %v532, %v632
        %vm634 = vcmask 917312
        %v635 = vsel %vm634, %v633, %v628
        %v636 = vadd.s32 %v540, 4294967184
        %v637 = vlaneseq
        %v638 = vshrl.u32 %v637, 7
        %v639 = vsub.s32 %v636, %v638
        %v640 = vrot.slane %v535, %v639
        %vm641 = vcmask 982912
        %v642 = vsel %vm641, %v640, %v635
        %v643 = vadd.s32 %v540, 4294967176
        %v644 = vlaneseq
        %v645 = vshrl.u32 %v644, 7
        %v646 = vsub.s32 %v643, %v645
        %v647 = vrot.slane %v538, %v646
        %vm648 = vcmask 1048512
        %v649 = vsel %vm648, %v647, %v642
        %650 = vst [vmem:[%s175] sm:$0x1] %v649
        %s651 = sand.u32 %s92, 1
        %s652 = scalar_lea.sflag [#allocation3], %s651
        %s653 = sand.u32 %s92, 1
        %s654 = scalar_lea.vmem [#allocation2], %s653
        // Predicated region
        $region29: #{tpu_custom_call.1} parent=27 // pred_check
          %p655 = pneg %p102
        $region30: #{tpu_custom_call.1} parent=27 // pred_check_branch
          %657 = sbr.rel (%p655) target = $region32
        $region31: #{tpu_custom_call.1} parent=27 // pred_region
          %s659 = ssub.s32 16, 16
          %660 = vsyncadd %s652, %s659
          %s661 = sadd.s32 %s21, %s20
          %s662 = smul.addr %s661, 16
          %s663 = scalar_lea.hbm %s2, %s662
          %s665 = sshll.u32 %s654, 4
          %s666 = int_to_ptr.vmem [resolvable:$true] %s665
          %668 = dma.vmem_to_hbm [thread:$0]  %s666, 16, %s663, %s652
        $region32: #{tpu_custom_call.1} parent=27 // pred_fallthru
          _
      $region28: #{tpu_custom_call.1} parent=5 // pred_fallthru
        _
      %p669 = scmp.le.s32.totalorder 2, %s11
      // Predicated region
      $region33: #{tpu_custom_call.1} parent=5 // pred_check
        %p670 = pneg %p669
      $region34: #{tpu_custom_call.1} parent=5 // pred_check_branch
        %672 = sbr.rel (%p670) target = $region36
      $region35: #{tpu_custom_call.1} parent=5 // pred_region
        %s673 = ssub.s32 %s11, 2
        // Predicated region
        $region37: #{tpu_custom_call.1} parent=35 // pred_check
          %p674 = pneg %p108
        $region38: #{tpu_custom_call.1} parent=35 // pred_check_branch
          %676 = sbr.rel (%p674) target = $region40
        $region39: #{tpu_custom_call.1} parent=35 // pred_region
          %s677 = sand.u32 %s93, 1
          %s678 = scalar_lea.sflag [#allocation3], %s677
          %s679 = sand.u32 %s93, 1
          %s680 = scalar_lea.vmem [#allocation2], %s679
          %681 = dma.done %s678, 16
        $region40: #{tpu_custom_call.1} parent=35 // pred_fallthru
          _
      $region36: #{tpu_custom_call.1} parent=5 // pred_fallthru
        _
    $region6: #{tpu_custom_call.1} parent=1 // loop_footer
      %s15 = sadd.s32 1, %s11
    $region7: #{tpu_custom_call.1} parent=1 // loop_footer_branch
      %10 = sbr.rel target = $region3
    $region8: #{tpu_custom_call.1} parent=1 // loop_exit
      _
    %682 = vsyncpa [#allocation3], 1
    %s683 = scalar_lea.sflag [#allocation3], 1
    %684 = vsyncpa %s683, 1

</llo_original>
